<compile_context>
chip_gen: v7x
topology: tpu7x:2x2x1
jax: 0.10.0
libtpu: 0.0.40
codegen_flags: <defaults>
</compile_context>

<pallas_src>
import functools

import jax
import jax.numpy as jnp
from jax.experimental import pallas as pl
from jax.experimental.pallas import tpu as pltpu


def _round_up(x: int, m: int) -> int:
    return ((x + m - 1) // m) * m


def _vmem_cap_bytes() -> int:
    # Leave headroom under physical VMEM (v7x: 64 MiB, v5e/v6e: 128 MiB).
    try:
        return int(0.75 * pltpu.get_tpu_info().vmem_capacity_bytes)
    except Exception:
        return 48 * 1024 * 1024  # v7x-safe fallback


def gnn_tile_kernel(alpha_ref, x_ref, w_ref, o_ref, *, mxu_dtype):
    # alpha_ref: (1,) f32 SMEM (shared PReLU slope)
    # x_ref:     (TN, in_ft)      VMEM tile (relation r, node tile t), input dtype
    # w_ref:     (in_ft, out_ft)  VMEM tile (relation r; resident across node tiles)
    # o_ref:     (TN, out_ft)     VMEM output tile
    e = jnp.dot(x_ref[...].astype(mxu_dtype),          # VPU cast, MXU matmul,
                w_ref[...].astype(mxu_dtype),           # f32 accumulation
                preferred_element_type=jnp.float32)
    a = alpha_ref[0]
    o_ref[...] = jnp.where(e >= 0, e, a * e).astype(o_ref.dtype)   # PReLU (f32, VPU)


def gnn_fused_kernel(alpha_ref, x_ref, w_ref, o_ref, *, mxu_dtype):
    # Small-problem path: everything VMEM resident, one batched MXU matmul,
    # a single kernel invocation (no per-grid-step overhead).
    # x_ref: (nb_rel, N, in_ft), w_ref: (nb_rel, in_ft, out_ft), o_ref: (nb_rel, N, out_ft)
    e = jnp.einsum("rni,rio->rno",
                   x_ref[...].astype(mxu_dtype),
                   w_ref[...].astype(mxu_dtype),
                   preferred_element_type=jnp.float32)
    a = alpha_ref[0]
    o_ref[...] = jnp.where(e >= 0, e, a * e).astype(o_ref.dtype)


def gnn_forward(embs, weights_t, alpha, *, tn: int = 1024, allow_fused: bool = True,
                out_dtype=None, mxu_dtype=jnp.bfloat16):
    """embs: (nb_rel, N, in_ft); weights_t: (nb_rel, in_ft, out_ft); alpha: scalar."""
    nb_rel, n, in_ft = embs.shape
    wr, wk, out_ft = weights_t.shape
    assert wr == nb_rel and wk == in_ft
    out_dtype = embs.dtype if out_dtype is None else out_dtype

    x_isize = jnp.dtype(embs.dtype).itemsize
    w_isize = jnp.dtype(weights_t.dtype).itemsize
    o_isize = jnp.dtype(out_dtype).itemsize
    m_isize = jnp.dtype(mxu_dtype).itemsize

    alpha_arr = jnp.asarray(alpha, jnp.float32).reshape(1)
    vmem_cap = _vmem_cap_bytes()

    flops = 2 * nb_rel * n * in_ft * out_ft
    hbm_bytes = (nb_rel * n * in_ft * x_isize
                 + nb_rel * in_ft * out_ft * w_isize
                 + nb_rel * n * out_ft * o_isize)
    cost = pl.CostEstimate(flops=flops, transcendentals=0, bytes_accessed=hbm_bytes)

    # ---------- Small-problem fused path: one kernel invocation. ----------
    fused_bytes = (nb_rel * n * in_ft * (x_isize + m_isize)          # x + cast copy
                   + nb_rel * in_ft * out_ft * (w_isize + m_isize)   # w + cast copy
                   + nb_rel * n * out_ft * (o_isize + 4))            # out + f32 acc
    if allow_fused and fused_bytes <= 12 * 1024 * 1024:
        vmem_limit = int(min(max(2 * fused_bytes, 16 * 1024 * 1024), vmem_cap))
        return pl.pallas_call(
            functools.partial(gnn_fused_kernel, mxu_dtype=mxu_dtype),
            out_shape=jax.ShapeDtypeStruct((nb_rel, n, out_ft), out_dtype),
            in_specs=[
                pl.BlockSpec(memory_space=pltpu.MemorySpace.SMEM),   # alpha
                pl.BlockSpec(memory_space=pltpu.MemorySpace.VMEM),   # embs (whole)
                pl.BlockSpec(memory_space=pltpu.MemorySpace.VMEM),   # weights (whole)
            ],
            out_specs=pl.BlockSpec(memory_space=pltpu.MemorySpace.VMEM),
            compiler_params=pltpu.CompilerParams(vmem_limit_bytes=vmem_limit),
            cost_estimate=cost,
        )(alpha_arr, embs, weights_t)

    # ---------- General path: grid over (relation, node tile). ----------
    if n <= tn:
        tn_eff, nt = n, 1                  # block dim == full array dim (always legal)
    else:
        tn_eff = max(8, (tn // 8) * 8)     # sublane-aligned node tile
        nt = pl.cdiv(n, tn_eff)
        if (nb_rel * nt) % 2 == 1:         # v7x: keep total grid steps even for 2-TC balance
            nt += 1
            tn_eff = max(8, _round_up(pl.cdiv(n, nt), 8))
            nt = pl.cdiv(n, tn_eff)

    # Double-buffered tiles (input dtype) + in-kernel cast copies / f32 result, with margin.
    tile_bytes = (2 * tn_eff * in_ft * x_isize
                  + 2 * in_ft * out_ft * w_isize
                  + 2 * tn_eff * out_ft * o_isize
                  + tn_eff * in_ft * m_isize
                  + in_ft * out_ft * m_isize
                  + tn_eff * out_ft * 4)
    vmem_limit = int(min(max(2 * tile_bytes, 16 * 1024 * 1024), vmem_cap))

    return pl.pallas_call(
        functools.partial(gnn_tile_kernel, mxu_dtype=mxu_dtype),
        out_shape=jax.ShapeDtypeStruct((nb_rel, n, out_ft), out_dtype),
        grid=(nb_rel, nt),
        in_specs=[
            pl.BlockSpec(memory_space=pltpu.MemorySpace.SMEM),               # alpha
            pl.BlockSpec((None, tn_eff, in_ft), lambda r, t: (r, t, 0)),     # embs[r] node tile
            pl.BlockSpec((None, in_ft, out_ft), lambda r, t: (r, 0, 0)),     # W_r (resident over t)
        ],
        out_specs=pl.BlockSpec((None, tn_eff, out_ft), lambda r, t: (r, t, 0)),
        compiler_params=pltpu.CompilerParams(
            dimension_semantics=("parallel", "parallel"),
            vmem_limit_bytes=vmem_limit,
        ),
        cost_estimate=cost,
    )(alpha_arr, embs, weights_t)


def init_params(key, nb_rel, in_ft, out_ft):
    """Xavier-uniform init per relation (deterministic), stored pre-transposed."""
    bound = (6.0 / (in_ft + out_ft)) ** 0.5
    keys = jax.random.split(key, nb_rel)
    ws = [
        jax.random.uniform(k, (out_ft, in_ft), jnp.float32, -bound, bound).T
        for k in keys
    ]
    weights_t = jnp.stack(ws, axis=0)           # (nb_rel, in_ft, out_ft)
    alpha = jnp.float32(0.25)                   # nn.PReLU() default init
    return weights_t, alpha


if __name__ == "__main__":
    # Small, module-consistent shapes: 3 relations, 200 nodes, 128 -> 96 features.
    nb_rel, N, in_ft, out_ft = 3, 200, 128, 96

    key = jax.random.PRNGKey(0)
    k_emb, k_w, k_emb2 = jax.random.split(key, 3)
    embs = jax.random.normal(k_emb, (nb_rel, N, in_ft), jnp.float32)
    weights_t, alpha = init_params(k_w, nb_rel, in_ft, out_ft)

    def ref_fn(x, w, a):
        # Pure-JAX reference with the same bf16 operand rounding (f32 accumulate).
        xb = x.astype(jnp.bfloat16).astype(jnp.float32)
        wb = w.astype(jnp.bfloat16).astype(jnp.float32)
        e = jnp.einsum("rni,rio->rno", xb, wb)
        return jnp.where(e >= 0, e, a * e)

    # Path 1: fused single-invocation kernel (small-problem path).
    out = jax.block_until_ready(gnn_forward(embs, weights_t, alpha))
    ref = ref_fn(embs, weights_t, alpha)
    assert out.shape == (nb_rel, N, out_ft)
    assert jnp.allclose(out, ref, atol=2e-3, rtol=2e-3)

    # Path 2: tiled grid with a ragged node tail (exercises the general path).
    N2 = 1000
    embs2 = jax.random.normal(k_emb2, (nb_rel, N2, in_ft), jnp.float32)
    out2 = jax.block_until_ready(
        gnn_forward(embs2, weights_t, alpha, tn=256, allow_fused=False))
    ref2 = ref_fn(embs2, weights_t, alpha)
    assert out2.shape == (nb_rel, N2, out_ft)
    assert jnp.allclose(out2, ref2, atol=2e-3, rtol=2e-3)

    print("KERNEL_OK")
</pallas_src>

<mosaic_0001>
module attributes {stable_mosaic.version = 11 : i64} {
  func.func @gnn_fused_kernel(%arg0: memref<1xf32, #tpu.memory_space<smem>>, %arg1: memref<3x200x128xf32, #tpu.memory_space<vmem>>, %arg2: memref<3x128x96xf32, #tpu.memory_space<vmem>>, %arg3: memref<3x200x96xf32, #tpu.memory_space<vmem>>) attributes {dimension_semantics = [], scalar_prefetch = 0 : i64, scratch_operands = 0 : i64, tpu.core_type = #tpu.core_type<tc>} {
    %c0 = arith.constant 0 : index
    %c0_0 = arith.constant 0 : index
    %c0_1 = arith.constant 0 : index
    %0 = vector.load %arg1[%c0, %c0_0, %c0_1] : memref<3x200x128xf32, #tpu.memory_space<vmem>>, vector<3x200x128xf32>
    %1 = arith.truncf %0 : vector<3x200x128xf32> to vector<3x200x128xbf16>
    %c0_2 = arith.constant 0 : index
    %c0_3 = arith.constant 0 : index
    %c0_4 = arith.constant 0 : index
    %2 = vector.load %arg2[%c0_2, %c0_3, %c0_4] : memref<3x128x96xf32, #tpu.memory_space<vmem>>, vector<3x128x96xf32>
    %3 = arith.truncf %2 : vector<3x128x96xf32> to vector<3x128x96xbf16>
    "tpu.trace_start"() <{level = 10 : i32, message = "rni,rio->rno"}> : () -> ()
    %cst = arith.constant dense<0.000000e+00> : vector<3x200x96xf32>
    %4 = tpu.matmul %1, %3, %cst {dimension_numbers = #tpu.dot_dimension_numbers<[2], [1], [1], [2], [0, 0, 0, 1, 1, 2], [0], [0]>} : vector<3x200x128xbf16>, vector<3x128x96xbf16>, vector<3x200x96xf32> -> vector<3x200x96xf32>
    "tpu.trace_stop"() : () -> ()
    %c0_5 = arith.constant 0 : index
    %5 = memref.load %arg0[%c0_5] : memref<1xf32, #tpu.memory_space<smem>>
    %cst_6 = arith.constant 0.000000e+00 : f32
    %6 = vector.broadcast %cst_6 : f32 to vector<3x200x96xf32>
    %7 = arith.cmpf oge, %4, %6 : vector<3x200x96xf32>
    %8 = vector.broadcast %5 : f32 to vector<3x200x96xf32>
    %9 = arith.mulf %8, %4 : vector<3x200x96xf32>
    %10 = arith.select %7, %4, %9 : vector<3x200x96xi1>, vector<3x200x96xf32>
    %c0_7 = arith.constant 0 : index
    %c0_8 = arith.constant 0 : index
    %c0_9 = arith.constant 0 : index
    %11 = vector.load %arg3[%c0_7, %c0_8, %c0_9] : memref<3x200x96xf32, #tpu.memory_space<vmem>>, vector<3x200x96xf32>
    tpu.vector_store %arg3[%c0_7, %c0_8, %c0_9], %10 {strides = array<i32>} : memref<3x200x96xf32, #tpu.memory_space<vmem>>, vector<3x200x96xf32>,
    return
  }
}

</mosaic_0001>

<llo_original>
// kernel: tpu_custom_call.1
$region0: #{tpu_custom_call.1}
  #allocation0 [shape = 'u32[]', space=smem, size = 0x4, offset = 0x4, fixed_abs, tag = 'smem constant byte address 0x4 - core index']
  #allocation1 [shape = 'u32[144,128]{1,0:T(1,128)}', space=vmem, size = 0x12000, scoped, tag = 'internal scratch']
  #allocation2 [shape = 'f32[1]{0:T(128)S(6)}', space=smem, size = 0x200, scoped, tag = 'scoped memory for tpu_custom_call.1']
  %s0 = inlined_call_operand.<no memory space> [shape: f32[1], index: 0, kind: input, shape index: {}]
  %s1 = inlined_call_operand.vmem [shape: f32[3,200,128], index: 1, kind: input, shape index: {}]
  %s2 = inlined_call_operand.vmem [shape: f32[3,128,96], index: 2, kind: input, shape index: {}]
  %s3 = inlined_call_operand.vmem [shape: f32[3,200,96], index: 3, kind: output, shape index: {}]
  %s4 = sld [smem:[#allocation0]]
  $region22: #{tpu_custom_call.1} parent=0
    _
  %s6 = ssub.s32 1, %s4
  %s7 = scalar_select 0, %s6, %s4
  %8 = sst [smem:[#allocation2]] %s0
  // Predicated region
  $region2: #{tpu_custom_call.1} parent=0 // pred_check
    _
  $region3: #{tpu_custom_call.1} parent=0 // pred_check_branch
    %10 = sbr.rel (0) target = $region5
  $region4: #{tpu_custom_call.1} parent=0 // pred_region
    _
  $region5: #{tpu_custom_call.1} parent=0 // pred_fallthru
    _
  // Predicated region
  $region6: #{tpu_custom_call.1} parent=0 // pred_check
    _
  $region7: #{tpu_custom_call.1} parent=0 // pred_check_branch
    %12 = sbr.rel (0) target = $region9
  $region8: #{tpu_custom_call.1} parent=0 // pred_region
    _
  $region9: #{tpu_custom_call.1} parent=0 // pred_fallthru
    _
  // Predicated region
  $region10: #{tpu_custom_call.1} parent=0 // pred_check
    _
  $region11: #{tpu_custom_call.1} parent=0 // pred_check_branch
    %14 = sbr.rel (0) target = $region13
  $region12: #{tpu_custom_call.1} parent=0 // pred_region
    _
  $region13: #{tpu_custom_call.1} parent=0 // pred_fallthru
    _
  %v16 = vld [vmem:[%s1] sm:$0xff]
  %v17 = vld [vmem:[%s1 + $0x8] sm:$0xff]
  %v18 = vld [vmem:[%s1 + $0x10] sm:$0xff]
  %v19 = vld [vmem:[%s1 + $0x18] sm:$0xff]
  %v20 = vld [vmem:[%s1 + $0x20] sm:$0xff]
  %v21 = vld [vmem:[%s1 + $0x28] sm:$0xff]
  %v22 = vld [vmem:[%s1 + $0x30] sm:$0xff]
  %v23 = vld [vmem:[%s1 + $0x38] sm:$0xff]
  %v24 = vld [vmem:[%s1 + $0x40] sm:$0xff]
  %v25 = vld [vmem:[%s1 + $0x48] sm:$0xff]
  %v26 = vld [vmem:[%s1 + $0x50] sm:$0xff]
  %v27 = vld [vmem:[%s1 + $0x58] sm:$0xff]
  %v28 = vld [vmem:[%s1 + $0x60] sm:$0xff]
  %v29 = vld [vmem:[%s1 + $0x68] sm:$0xff]
  %v30 = vld [vmem:[%s1 + $0x70] sm:$0xff]
  %v31 = vld [vmem:[%s1 + $0x78] sm:$0xff]
  %v32 = vld [vmem:[%s1 + $0x80] sm:$0xff]
  %v33 = vld [vmem:[%s1 + $0x88] sm:$0xff]
  %v34 = vld [vmem:[%s1 + $0x90] sm:$0xff]
  %v35 = vld [vmem:[%s1 + $0x98] sm:$0xff]
  %v36 = vld [vmem:[%s1 + $0xa0] sm:$0xff]
  %v37 = vld [vmem:[%s1 + $0xa8] sm:$0xff]
  %v38 = vld [vmem:[%s1 + $0xb0] sm:$0xff]
  %v39 = vld [vmem:[%s1 + $0xb8] sm:$0xff]
  %v40 = vld [vmem:[%s1 + $0xc0] sm:$0xff]
  %v41 = vld [vmem:[%s1 + $0xc8] sm:$0xff]
  %v42 = vld [vmem:[%s1 + $0xd0] sm:$0xff]
  %v43 = vld [vmem:[%s1 + $0xd8] sm:$0xff]
  %v44 = vld [vmem:[%s1 + $0xe0] sm:$0xff]
  %v45 = vld [vmem:[%s1 + $0xe8] sm:$0xff]
  %v46 = vld [vmem:[%s1 + $0xf0] sm:$0xff]
  %v47 = vld [vmem:[%s1 + $0xf8] sm:$0xff]
  %v48 = vld [vmem:[%s1 + $0x100] sm:$0xff]
  %v49 = vld [vmem:[%s1 + $0x108] sm:$0xff]
  %v50 = vld [vmem:[%s1 + $0x110] sm:$0xff]
  %v51 = vld [vmem:[%s1 + $0x118] sm:$0xff]
  %v52 = vld [vmem:[%s1 + $0x120] sm:$0xff]
  %v53 = vld [vmem:[%s1 + $0x128] sm:$0xff]
  %v54 = vld [vmem:[%s1 + $0x130] sm:$0xff]
  %v55 = vld [vmem:[%s1 + $0x138] sm:$0xff]
  %v56 = vld [vmem:[%s1 + $0x140] sm:$0xff]
  %v57 = vld [vmem:[%s1 + $0x148] sm:$0xff]
  %v58 = vld [vmem:[%s1 + $0x150] sm:$0xff]
  %v59 = vld [vmem:[%s1 + $0x158] sm:$0xff]
  %v60 = vld [vmem:[%s1 + $0x160] sm:$0xff]
  %v61 = vld [vmem:[%s1 + $0x168] sm:$0xff]
  %v62 = vld [vmem:[%s1 + $0x170] sm:$0xff]
  %v63 = vld [vmem:[%s1 + $0x178] sm:$0xff]
  %v64 = vld [vmem:[%s1 + $0x180] sm:$0xff]
  %v65 = vld [vmem:[%s1 + $0x188] sm:$0xff]
  %v66 = vld [vmem:[%s1 + $0x190] sm:$0xff]
  %v67 = vld [vmem:[%s1 + $0x198] sm:$0xff]
  %v68 = vld [vmem:[%s1 + $0x1a0] sm:$0xff]
  %v69 = vld [vmem:[%s1 + $0x1a8] sm:$0xff]
  %v70 = vld [vmem:[%s1 + $0x1b0] sm:$0xff]
  %v71 = vld [vmem:[%s1 + $0x1b8] sm:$0xff]
  %v72 = vld [vmem:[%s1 + $0x1c0] sm:$0xff]
  %v73 = vld [vmem:[%s1 + $0x1c8] sm:$0xff]
  %v74 = vld [vmem:[%s1 + $0x1d0] sm:$0xff]
  %v75 = vld [vmem:[%s1 + $0x1d8] sm:$0xff]
  %v76 = vld [vmem:[%s1 + $0x1e0] sm:$0xff]
  %v77 = vld [vmem:[%s1 + $0x1e8] sm:$0xff]
  %v78 = vld [vmem:[%s1 + $0x1f0] sm:$0xff]
  %v79 = vld [vmem:[%s1 + $0x1f8] sm:$0xff]
  %v80 = vld [vmem:[%s1 + $0x200] sm:$0xff]
  %v81 = vld [vmem:[%s1 + $0x208] sm:$0xff]
  %v82 = vld [vmem:[%s1 + $0x210] sm:$0xff]
  %v83 = vld [vmem:[%s1 + $0x218] sm:$0xff]
  %v84 = vld [vmem:[%s1 + $0x220] sm:$0xff]
  %v85 = vld [vmem:[%s1 + $0x228] sm:$0xff]
  %v86 = vld [vmem:[%s1 + $0x230] sm:$0xff]
  %v87 = vld [vmem:[%s1 + $0x238] sm:$0xff]
  %v88 = vld [vmem:[%s1 + $0x240] sm:$0xff]
  %v89 = vld [vmem:[%s1 + $0x248] sm:$0xff]
  %v90 = vld [vmem:[%s1 + $0x250] sm:$0xff]
  %v91 = vpack.c.bf16 %v17, %v16
  %v92 = vpack.c.bf16 %v19, %v18
  %v93 = vpack.c.bf16 %v21, %v20
  %v94 = vpack.c.bf16 %v23, %v22
  %v95 = vpack.c.bf16 %v25, %v24
  %v96 = vpack.c.bf16 %v27, %v26
  %v97 = vpack.c.bf16 %v29, %v28
  %v98 = vpack.c.bf16 %v31, %v30
  %v99 = vpack.c.bf16 %v33, %v32
  %v100 = vpack.c.bf16 %v35, %v34
  %v101 = vpack.c.bf16 %v37, %v36
  %v102 = vpack.c.bf16 %v39, %v38
  %v103 = vpack.c.bf16 %v40, %v40
  %v104 = vpack.c.bf16 %v42, %v41
  %v105 = vpack.c.bf16 %v44, %v43
  %v106 = vpack.c.bf16 %v46, %v45
  %v107 = vpack.c.bf16 %v48, %v47
  %v108 = vpack.c.bf16 %v50, %v49
  %v109 = vpack.c.bf16 %v52, %v51
  %v110 = vpack.c.bf16 %v54, %v53
  %v111 = vpack.c.bf16 %v56, %v55
  %v112 = vpack.c.bf16 %v58, %v57
  %v113 = vpack.c.bf16 %v60, %v59
  %v114 = vpack.c.bf16 %v62, %v61
  %v115 = vpack.c.bf16 %v64, %v63
  %v116 = vpack.c.bf16 %v65, %v65
  %v117 = vpack.c.bf16 %v67, %v66
  %v118 = vpack.c.bf16 %v69, %v68
  %v119 = vpack.c.bf16 %v71, %v70
  %v120 = vpack.c.bf16 %v73, %v72
  %v121 = vpack.c.bf16 %v75, %v74
  %v122 = vpack.c.bf16 %v77, %v76
  %v123 = vpack.c.bf16 %v79, %v78
  %v124 = vpack.c.bf16 %v81, %v80
  %v125 = vpack.c.bf16 %v83, %v82
  %v126 = vpack.c.bf16 %v85, %v84
  %v127 = vpack.c.bf16 %v87, %v86
  %v128 = vpack.c.bf16 %v89, %v88
  %v129 = vpack.c.bf16 %v90, %v90
  %v130 = vld [vmem:[%s2] sm:$0xff]
  %v131 = vld [vmem:[%s2 + $0x8] sm:$0xff]
  %v132 = vld [vmem:[%s2 + $0x10] sm:$0xff]
  %v133 = vld [vmem:[%s2 + $0x18] sm:$0xff]
  %v134 = vld [vmem:[%s2 + $0x20] sm:$0xff]
  %v135 = vld [vmem:[%s2 + $0x28] sm:$0xff]
  %v136 = vld [vmem:[%s2 + $0x30] sm:$0xff]
  %v137 = vld [vmem:[%s2 + $0x38] sm:$0xff]
  %v138 = vld [vmem:[%s2 + $0x40] sm:$0xff]
  %v139 = vld [vmem:[%s2 + $0x48] sm:$0xff]
  %v140 = vld [vmem:[%s2 + $0x50] sm:$0xff]
  %v141 = vld [vmem:[%s2 + $0x58] sm:$0xff]
  %v142 = vld [vmem:[%s2 + $0x60] sm:$0xff]
  %v143 = vld [vmem:[%s2 + $0x68] sm:$0xff]
  %v144 = vld [vmem:[%s2 + $0x70] sm:$0xff]
  %v145 = vld [vmem:[%s2 + $0x78] sm:$0xff]
  %v146 = vld [vmem:[%s2 + $0x80] sm:$0xff]
  %v147 = vld [vmem:[%s2 + $0x88] sm:$0xff]
  %v148 = vld [vmem:[%s2 + $0x90] sm:$0xff]
  %v149 = vld [vmem:[%s2 + $0x98] sm:$0xff]
  %v150 = vld [vmem:[%s2 + $0xa0] sm:$0xff]
  %v151 = vld [vmem:[%s2 + $0xa8] sm:$0xff]
  %v152 = vld [vmem:[%s2 + $0xb0] sm:$0xff]
  %v153 = vld [vmem:[%s2 + $0xb8] sm:$0xff]
  %v154 = vld [vmem:[%s2 + $0xc0] sm:$0xff]
  %v155 = vld [vmem:[%s2 + $0xc8] sm:$0xff]
  %v156 = vld [vmem:[%s2 + $0xd0] sm:$0xff]
  %v157 = vld [vmem:[%s2 + $0xd8] sm:$0xff]
  %v158 = vld [vmem:[%s2 + $0xe0] sm:$0xff]
  %v159 = vld [vmem:[%s2 + $0xe8] sm:$0xff]
  %v160 = vld [vmem:[%s2 + $0xf0] sm:$0xff]
  %v161 = vld [vmem:[%s2 + $0xf8] sm:$0xff]
  %v162 = vld [vmem:[%s2 + $0x100] sm:$0xff]
  %v163 = vld [vmem:[%s2 + $0x108] sm:$0xff]
  %v164 = vld [vmem:[%s2 + $0x110] sm:$0xff]
  %v165 = vld [vmem:[%s2 + $0x118] sm:$0xff]
  %v166 = vld [vmem:[%s2 + $0x120] sm:$0xff]
  %v167 = vld [vmem:[%s2 + $0x128] sm:$0xff]
  %v168 = vld [vmem:[%s2 + $0x130] sm:$0xff]
  %v169 = vld [vmem:[%s2 + $0x138] sm:$0xff]
  %v170 = vld [vmem:[%s2 + $0x140] sm:$0xff]
  %v171 = vld [vmem:[%s2 + $0x148] sm:$0xff]
  %v172 = vld [vmem:[%s2 + $0x150] sm:$0xff]
  %v173 = vld [vmem:[%s2 + $0x158] sm:$0xff]
  %v174 = vld [vmem:[%s2 + $0x160] sm:$0xff]
  %v175 = vld [vmem:[%s2 + $0x168] sm:$0xff]
  %v176 = vld [vmem:[%s2 + $0x170] sm:$0xff]
  %v177 = vld [vmem:[%s2 + $0x178] sm:$0xff]
  %v178 = vpack.c.bf16 %v131, %v130
  %v179 = vpack.c.bf16 %v133, %v132
  %v180 = vpack.c.bf16 %v135, %v134
  %v181 = vpack.c.bf16 %v137, %v136
  %v182 = vpack.c.bf16 %v139, %v138
  %v183 = vpack.c.bf16 %v141, %v140
  %v184 = vpack.c.bf16 %v143, %v142
  %v185 = vpack.c.bf16 %v145, %v144
  %v186 = vpack.c.bf16 %v147, %v146
  %v187 = vpack.c.bf16 %v149, %v148
  %v188 = vpack.c.bf16 %v151, %v150
  %v189 = vpack.c.bf16 %v153, %v152
  %v190 = vpack.c.bf16 %v155, %v154
  %v191 = vpack.c.bf16 %v157, %v156
  %v192 = vpack.c.bf16 %v159, %v158
  %v193 = vpack.c.bf16 %v161, %v160
  %v194 = vpack.c.bf16 %v163, %v162
  %v195 = vpack.c.bf16 %v165, %v164
  %v196 = vpack.c.bf16 %v167, %v166
  %v197 = vpack.c.bf16 %v169, %v168
  %v198 = vpack.c.bf16 %v171, %v170
  %v199 = vpack.c.bf16 %v173, %v172
  %v200 = vpack.c.bf16 %v175, %v174
  %v201 = vpack.c.bf16 %v177, %v176
  %202 = vmatprep.subr.bf16.mxu0 0
  %203 = vmatpush1.bf16.msra.mxu0 %v178
  %204 = vmatprep.subr.bf16.mxu0 0
  %205 = vmatpush1.bf16.msra.mxu0 %v179
  %206 = vmatprep.subr.bf16.mxu0 0
  %207 = vmatpush1.bf16.msra.mxu0 %v180
  %208 = vmatprep.subr.bf16.mxu0 0
  %209 = vmatpush1.bf16.msra.mxu0 %v181
  %210 = vmatprep.subr.bf16.mxu0 0
  %211 = vmatpush1.bf16.msra.mxu0 %v182
  %212 = vmatprep.subr.bf16.mxu0 0
  %213 = vmatpush1.bf16.msra.mxu0 %v183
  %214 = vmatprep.subr.bf16.mxu0 0
  %215 = vmatpush1.bf16.msra.mxu0 %v184
  %216 = vmatprep.subr.bf16.mxu0 0
  %217 = vmatpush1.bf16.msra.mxu0 %v185
  %218 = vmatprep.subr.bf16.mxu0 0
  %219 = vmatpush1.bf16.msra.mxu0 0
  %220 = vmatprep.subr.bf16.mxu0 0
  %221 = vmatpush1.bf16.msra.mxu0 0
  %222 = vmatprep.subr.bf16.mxu0 0
  %223 = vmatpush1.bf16.msra.mxu0 0
  %224 = vmatprep.subr.bf16.mxu0 0
  %225 = vmatpush1.bf16.msra.mxu0 0
  %226 = vmatprep.subr.bf16.mxu0 0
  %227 = vmatpush1.bf16.msra.mxu0 0
  %228 = vmatprep.subr.bf16.mxu0 0
  %229 = vmatpush1.bf16.msra.mxu0 0
  %230 = vmatprep.subr.bf16.mxu0 0
  %231 = vmatpush1.bf16.msra.mxu0 0
  %232 = vmatprep.subr.bf16.mxu0 0
  %233 = vmatpush1.bf16.msra.mxu0 0
  %234 = vmatprep.mubr.bf16.mxu0 0
  %235 = vmatmul.mubr.bf16.gmra.mrb[0].mxu0 %v91
  %v236 = vpop.f32.mrb[0].mxu0
  %v237 = vadd.f32 0.0, %v236
  %v238 = vpop.f32.mrb[0].mxu0
  %v239 = vpop.f32.mrb[0].mxu0
  %v240 = vadd.f32 0.0, %v239
  %v241 = vpop.f32.mrb[0].mxu0
  %242 = vmatprep.mubr.bf16.mxu0 0
  %243 = vmatmul.mubr.bf16.gmra.mrb[0].mxu0 %v92
  %v244 = vpop.f32.mrb[0].mxu0
  %v245 = vadd.f32 0.0, %v244
  %v246 = vpop.f32.mrb[0].mxu0
  %v247 = vpop.f32.mrb[0].mxu0
  %v248 = vadd.f32 0.0, %v247
  %v249 = vpop.f32.mrb[0].mxu0
  %250 = vmatprep.mubr.bf16.mxu0 0
  %251 = vmatmul.mubr.bf16.gmra.mrb[0].mxu0 %v93
  %v252 = vpop.f32.mrb[0].mxu0
  %v253 = vadd.f32 0.0, %v252
  %v254 = vpop.f32.mrb[0].mxu0
  %v255 = vpop.f32.mrb[0].mxu0
  %v256 = vadd.f32 0.0, %v255
  %v257 = vpop.f32.mrb[0].mxu0
  %258 = vmatprep.mubr.bf16.mxu0 0
  %259 = vmatmul.mubr.bf16.gmra.mrb[0].mxu0 %v94
  %v260 = vpop.f32.mrb[0].mxu0
  %v261 = vadd.f32 0.0, %v260
  %v262 = vpop.f32.mrb[0].mxu0
  %v263 = vpop.f32.mrb[0].mxu0
  %v264 = vadd.f32 0.0, %v263
  %v265 = vpop.f32.mrb[0].mxu0
  %266 = vmatprep.mubr.bf16.mxu0 0
  %267 = vmatmul.mubr.bf16.gmra.mrb[0].mxu0 %v95
  %v268 = vpop.f32.mrb[0].mxu0
  %v269 = vadd.f32 0.0, %v268
  %v270 = vpop.f32.mrb[0].mxu0
  %v271 = vpop.f32.mrb[0].mxu0
  %v272 = vadd.f32 0.0, %v271
  %v273 = vpop.f32.mrb[0].mxu0
  %274 = vmatprep.mubr.bf16.mxu0 0
  %275 = vmatmul.mubr.bf16.gmra.mrb[0].mxu0 %v96
  %v276 = vpop.f32.mrb[0].mxu0
  %v277 = vadd.f32 0.0, %v276
  %v278 = vpop.f32.mrb[0].mxu0
  %v279 = vpop.f32.mrb[0].mxu0
  %v280 = vadd.f32 0.0, %v279
  %v281 = vpop.f32.mrb[0].mxu0
  %282 = vmatprep.mubr.bf16.mxu0 0
  %283 = vmatmul.mubr.bf16.gmra.mrb[0].mxu0 %v97
  %v284 = vpop.f32.mrb[0].mxu0
  %v285 = vadd.f32 0.0, %v284
  %v286 = vpop.f32.mrb[0].mxu0
  %v287 = vpop.f32.mrb[0].mxu0
  %v288 = vadd.f32 0.0, %v287
  %v289 = vpop.f32.mrb[0].mxu0
  %290 = vmatprep.mubr.bf16.mxu0 0
  %291 = vmatmul.mubr.bf16.gmra.mrb[0].mxu0 %v98
  %v292 = vpop.f32.mrb[0].mxu0
  %v293 = vadd.f32 0.0, %v292
  %v294 = vpop.f32.mrb[0].mxu0
  %v295 = vpop.f32.mrb[0].mxu0
  %v296 = vadd.f32 0.0, %v295
  %v297 = vpop.f32.mrb[0].mxu0
  %298 = vmatprep.mubr.bf16.mxu0 0
  %299 = vmatmul.mubr.bf16.gmra.mrb[0].mxu0 %v99
  %v300 = vpop.f32.mrb[0].mxu0
  %v301 = vadd.f32 0.0, %v300
  %v302 = vpop.f32.mrb[0].mxu0
  %v303 = vpop.f32.mrb[0].mxu0
  %v304 = vadd.f32 0.0, %v303
  %v305 = vpop.f32.mrb[0].mxu0
  %306 = vmatprep.mubr.bf16.mxu0 0
  %307 = vmatmul.mubr.bf16.gmra.mrb[0].mxu0 %v100
  %v308 = vpop.f32.mrb[0].mxu0
  %v309 = vadd.f32 0.0, %v308
  %v310 = vpop.f32.mrb[0].mxu0
  %v311 = vpop.f32.mrb[0].mxu0
  %v312 = vadd.f32 0.0, %v311
  %v313 = vpop.f32.mrb[0].mxu0
  %314 = vmatprep.mubr.bf16.mxu0 0
  %315 = vmatmul.mubr.bf16.gmra.mrb[0].mxu0 %v101
  %v316 = vpop.f32.mrb[0].mxu0
  %v317 = vadd.f32 0.0, %v316
  %v318 = vpop.f32.mrb[0].mxu0
  %v319 = vpop.f32.mrb[0].mxu0
  %v320 = vadd.f32 0.0, %v319
  %v321 = vpop.f32.mrb[0].mxu0
  %322 = vmatprep.mubr.bf16.mxu0 0
  %323 = vmatmul.mubr.bf16.gmra.mrb[0].mxu0 %v102
  %v324 = vpop.f32.mrb[0].mxu0
  %v325 = vadd.f32 0.0, %v324
  %v326 = vpop.f32.mrb[0].mxu0
  %v327 = vpop.f32.mrb[0].mxu0
  %v328 = vadd.f32 0.0, %v327
  %v329 = vpop.f32.mrb[0].mxu0
  %330 = vmatprep.mubr.bf16.mxu0 0
  %331 = vmatmul.mubr.bf16.gmra.mrb[0].mxu0 %v103
  %v332 = vpop.f32.mrb[0].mxu0
  %v333 = vadd.f32 0.0, %v332
  %v334 = vpop.f32.mrb[0].mxu0
  %v335 = vpop.f32.mrb[0].mxu0
  %v336 = vpop.f32.mrb[0].mxu0
  %337 = vdwg.mxu0
  %338 = vmatprep.subr.bf16.mxu0 0
  %339 = vmatpush1.bf16.msra.mxu0 %v186
  %340 = vmatprep.subr.bf16.mxu0 0
  %341 = vmatpush1.bf16.msra.mxu0 %v187
  %342 = vmatprep.subr.bf16.mxu0 0
  %343 = vmatpush1.bf16.msra.mxu0 %v188
  %344 = vmatprep.subr.bf16.mxu0 0
  %345 = vmatpush1.bf16.msra.mxu0 %v189
  %346 = vmatprep.subr.bf16.mxu0 0
  %347 = vmatpush1.bf16.msra.mxu0 %v190
  %348 = vmatprep.subr.bf16.mxu0 0
  %349 = vmatpush1.bf16.msra.mxu0 %v191
  %350 = vmatprep.subr.bf16.mxu0 0
  %351 = vmatpush1.bf16.msra.mxu0 %v192
  %352 = vmatprep.subr.bf16.mxu0 0
  %353 = vmatpush1.bf16.msra.mxu0 %v193
  %354 = vmatprep.subr.bf16.mxu0 0
  %355 = vmatpush1.bf16.msra.mxu0 0
  %356 = vmatprep.subr.bf16.mxu0 0
  %357 = vmatpush1.bf16.msra.mxu0 0
  %358 = vmatprep.subr.bf16.mxu0 0
  %359 = vmatpush1.bf16.msra.mxu0 0
  %360 = vmatprep.subr.bf16.mxu0 0
  %361 = vmatpush1.bf16.msra.mxu0 0
  %362 = vmatprep.subr.bf16.mxu0 0
  %363 = vmatpush1.bf16.msra.mxu0 0
  %364 = vmatprep.subr.bf16.mxu0 0
  %365 = vmatpush1.bf16.msra.mxu0 0
  %366 = vmatprep.subr.bf16.mxu0 0
  %367 = vmatpush1.bf16.msra.mxu0 0
  %368 = vmatprep.subr.bf16.mxu0 0
  %369 = vmatpush1.bf16.msra.mxu0 0
  %370 = vmatprep.mubr.bf16.mxu0 0
  %371 = vmatmul.mubr.bf16.gmra.mrb[0].mxu0 %v104
  %v372 = vpop.f32.mrb[0].mxu0
  %v373 = vadd.f32 0.0, %v372
  %v374 = vpop.f32.mrb[0].mxu0
  %v375 = vpop.f32.mrb[0].mxu0
  %v376 = vadd.f32 0.0, %v375
  %v377 = vpop.f32.mrb[0].mxu0
  %378 = vmatprep.mubr.bf16.mxu0 0
  %379 = vmatmul.mubr.bf16.gmra.mrb[0].mxu0 %v105
  %v380 = vpop.f32.mrb[0].mxu0
  %v381 = vadd.f32 0.0, %v380
  %v382 = vpop.f32.mrb[0].mxu0
  %v383 = vpop.f32.mrb[0].mxu0
  %v384 = vadd.f32 0.0, %v383
  %v385 = vpop.f32.mrb[0].mxu0
  %386 = vmatprep.mubr.bf16.mxu0 0
  %387 = vmatmul.mubr.bf16.gmra.mrb[0].mxu0 %v106
  %v388 = vpop.f32.mrb[0].mxu0
  %v389 = vadd.f32 0.0, %v388
  %v390 = vpop.f32.mrb[0].mxu0
  %v391 = vpop.f32.mrb[0].mxu0
  %v392 = vadd.f32 0.0, %v391
  %v393 = vpop.f32.mrb[0].mxu0
  %394 = vmatprep.mubr.bf16.mxu0 0
  %395 = vmatmul.mubr.bf16.gmra.mrb[0].mxu0 %v107
  %v396 = vpop.f32.mrb[0].mxu0
  %v397 = vadd.f32 0.0, %v396
  %v398 = vpop.f32.mrb[0].mxu0
  %v399 = vpop.f32.mrb[0].mxu0
  %v400 = vadd.f32 0.0, %v399
  %v401 = vpop.f32.mrb[0].mxu0
  %402 = vmatprep.mubr.bf16.mxu0 0
  %403 = vmatmul.mubr.bf16.gmra.mrb[0].mxu0 %v108
  %v404 = vpop.f32.mrb[0].mxu0
  %v405 = vadd.f32 0.0, %v404
  %v406 = vpop.f32.mrb[0].mxu0
  %v407 = vpop.f32.mrb[0].mxu0
  %v408 = vadd.f32 0.0, %v407
  %v409 = vpop.f32.mrb[0].mxu0
  %410 = vmatprep.mubr.bf16.mxu0 0
  %411 = vmatmul.mubr.bf16.gmra.mrb[0].mxu0 %v109
  %v412 = vpop.f32.mrb[0].mxu0
  %v413 = vadd.f32 0.0, %v412
  %v414 = vpop.f32.mrb[0].mxu0
  %v415 = vpop.f32.mrb[0].mxu0
  %v416 = vadd.f32 0.0, %v415
  %v417 = vpop.f32.mrb[0].mxu0
  %418 = vmatprep.mubr.bf16.mxu0 0
  %419 = vmatmul.mubr.bf16.gmra.mrb[0].mxu0 %v110
  %v420 = vpop.f32.mrb[0].mxu0
  %v421 = vadd.f32 0.0, %v420
  %v422 = vpop.f32.mrb[0].mxu0
  %v423 = vpop.f32.mrb[0].mxu0
  %v424 = vadd.f32 0.0, %v423
  %v425 = vpop.f32.mrb[0].mxu0
  %426 = vmatprep.mubr.bf16.mxu0 0
  %427 = vmatmul.mubr.bf16.gmra.mrb[0].mxu0 %v111
  %v428 = vpop.f32.mrb[0].mxu0
  %v429 = vadd.f32 0.0, %v428
  %v430 = vpop.f32.mrb[0].mxu0
  %v431 = vpop.f32.mrb[0].mxu0
  %v432 = vadd.f32 0.0, %v431
  %v433 = vpop.f32.mrb[0].mxu0
  %434 = vmatprep.mubr.bf16.mxu0 0
  %435 = vmatmul.mubr.bf16.gmra.mrb[0].mxu0 %v112
  %v436 = vpop.f32.mrb[0].mxu0
  %v437 = vadd.f32 0.0, %v436
  %v438 = vpop.f32.mrb[0].mxu0
  %v439 = vpop.f32.mrb[0].mxu0
  %v440 = vadd.f32 0.0, %v439
  %v441 = vpop.f32.mrb[0].mxu0
  %442 = vmatprep.mubr.bf16.mxu0 0
  %443 = vmatmul.mubr.bf16.gmra.mrb[0].mxu0 %v113
  %v444 = vpop.f32.mrb[0].mxu0
  %v445 = vadd.f32 0.0, %v444
  %v446 = vpop.f32.mrb[0].mxu0
  %v447 = vpop.f32.mrb[0].mxu0
  %v448 = vadd.f32 0.0, %v447
  %v449 = vpop.f32.mrb[0].mxu0
  %450 = vmatprep.mubr.bf16.mxu0 0
  %451 = vmatmul.mubr.bf16.gmra.mrb[0].mxu0 %v114
  %v452 = vpop.f32.mrb[0].mxu0
  %v453 = vadd.f32 0.0, %v452
  %v454 = vpop.f32.mrb[0].mxu0
  %v455 = vpop.f32.mrb[0].mxu0
  %v456 = vadd.f32 0.0, %v455
  %v457 = vpop.f32.mrb[0].mxu0
  %458 = vmatprep.mubr.bf16.mxu0 0
  %459 = vmatmul.mubr.bf16.gmra.mrb[0].mxu0 %v115
  %v460 = vpop.f32.mrb[0].mxu0
  %v461 = vadd.f32 0.0, %v460
  %v462 = vpop.f32.mrb[0].mxu0
  %v463 = vpop.f32.mrb[0].mxu0
  %v464 = vadd.f32 0.0, %v463
  %v465 = vpop.f32.mrb[0].mxu0
  %466 = vmatprep.mubr.bf16.mxu0 0
  %467 = vmatmul.mubr.bf16.gmra.mrb[0].mxu0 %v116
  %v468 = vpop.f32.mrb[0].mxu0
  %v469 = vadd.f32 0.0, %v468
  %v470 = vpop.f32.mrb[0].mxu0
  %v471 = vpop.f32.mrb[0].mxu0
  %v472 = vpop.f32.mrb[0].mxu0
  %473 = vdwg.mxu0
  %474 = vmatprep.subr.bf16.mxu0 0
  %475 = vmatpush1.bf16.msra.mxu0 %v194
  %476 = vmatprep.subr.bf16.mxu0 0
  %477 = vmatpush1.bf16.msra.mxu0 %v195
  %478 = vmatprep.subr.bf16.mxu0 0
  %479 = vmatpush1.bf16.msra.mxu0 %v196
  %480 = vmatprep.subr.bf16.mxu0 0
  %481 = vmatpush1.bf16.msra.mxu0 %v197
  %482 = vmatprep.subr.bf16.mxu0 0
  %483 = vmatpush1.bf16.msra.mxu0 %v198
  %484 = vmatprep.subr.bf16.mxu0 0
  %485 = vmatpush1.bf16.msra.mxu0 %v199
  %486 = vmatprep.subr.bf16.mxu0 0
  %487 = vmatpush1.bf16.msra.mxu0 %v200
  %488 = vmatprep.subr.bf16.mxu0 0
  %489 = vmatpush1.bf16.msra.mxu0 %v201
  %490 = vmatprep.subr.bf16.mxu0 0
  %491 = vmatpush1.bf16.msra.mxu0 0
  %492 = vmatprep.subr.bf16.mxu0 0
  %493 = vmatpush1.bf16.msra.mxu0 0
  %494 = vmatprep.subr.bf16.mxu0 0
  %495 = vmatpush1.bf16.msra.mxu0 0
  %496 = vmatprep.subr.bf16.mxu0 0
  %497 = vmatpush1.bf16.msra.mxu0 0
  %498 = vmatprep.subr.bf16.mxu0 0
  %499 = vmatpush1.bf16.msra.mxu0 0
  %500 = vmatprep.subr.bf16.mxu0 0
  %501 = vmatpush1.bf16.msra.mxu0 0
  %502 = vmatprep.subr.bf16.mxu0 0
  %503 = vmatpush1.bf16.msra.mxu0 0
  %504 = vmatprep.subr.bf16.mxu0 0
  %505 = vmatpush1.bf16.msra.mxu0 0
  %506 = vmatprep.mubr.bf16.mxu0 0
  %507 = vmatmul.mubr.bf16.gmra.mrb[0].mxu0 %v117
  %v508 = vpop.f32.mrb[0].mxu0
  %v509 = vadd.f32 0.0, %v508
  %v510 = vpop.f32.mrb[0].mxu0
  %v511 = vpop.f32.mrb[0].mxu0
  %v512 = vadd.f32 0.0, %v511
  %v513 = vpop.f32.mrb[0].mxu0
  %514 = vmatprep.mubr.bf16.mxu0 0
  %515 = vmatmul.mubr.bf16.gmra.mrb[0].mxu0 %v118
  %v516 = vpop.f32.mrb[0].mxu0
  %v517 = vadd.f32 0.0, %v516
  %v518 = vpop.f32.mrb[0].mxu0
  %v519 = vpop.f32.mrb[0].mxu0
  %v520 = vadd.f32 0.0, %v519
  %v521 = vpop.f32.mrb[0].mxu0
  %522 = vmatprep.mubr.bf16.mxu0 0
  %523 = vmatmul.mubr.bf16.gmra.mrb[0].mxu0 %v119
  %v524 = vpop.f32.mrb[0].mxu0
  %v525 = vadd.f32 0.0, %v524
  %v526 = vpop.f32.mrb[0].mxu0
  %v527 = vpop.f32.mrb[0].mxu0
  %v528 = vadd.f32 0.0, %v527
  %v529 = vpop.f32.mrb[0].mxu0
  %530 = vmatprep.mubr.bf16.mxu0 0
  %531 = vmatmul.mubr.bf16.gmra.mrb[0].mxu0 %v120
  %v532 = vpop.f32.mrb[0].mxu0
  %v533 = vadd.f32 0.0, %v532
  %v534 = vpop.f32.mrb[0].mxu0
  %v535 = vpop.f32.mrb[0].mxu0
  %v536 = vadd.f32 0.0, %v535
  %v537 = vpop.f32.mrb[0].mxu0
  %538 = vmatprep.mubr.bf16.mxu0 0
  %539 = vmatmul.mubr.bf16.gmra.mrb[0].mxu0 %v121
  %v540 = vpop.f32.mrb[0].mxu0
  %v541 = vadd.f32 0.0, %v540
  %v542 = vpop.f32.mrb[0].mxu0
  %v543 = vpop.f32.mrb[0].mxu0
  %v544 = vadd.f32 0.0, %v543
  %v545 = vpop.f32.mrb[0].mxu0
  %546 = vmatprep.mubr.bf16.mxu0 0
  %547 = vmatmul.mubr.bf16.gmra.mrb[0].mxu0 %v122
  %v548 = vpop.f32.mrb[0].mxu0
  %v549 = vadd.f32 0.0, %v548
  %v550 = vpop.f32.mrb[0].mxu0
  %v551 = vpop.f32.mrb[0].mxu0
  %v552 = vadd.f32 0.0, %v551
  %v553 = vpop.f32.mrb[0].mxu0
  %554 = vmatprep.mubr.bf16.mxu0 0
  %555 = vmatmul.mubr.bf16.gmra.mrb[0].mxu0 %v123
  %v556 = vpop.f32.mrb[0].mxu0
  %v557 = vadd.f32 0.0, %v556
  %v558 = vpop.f32.mrb[0].mxu0
  %v559 = vpop.f32.mrb[0].mxu0
  %v560 = vadd.f32 0.0, %v559
  %v561 = vpop.f32.mrb[0].mxu0
  %562 = vmatprep.mubr.bf16.mxu0 0
  %563 = vmatmul.mubr.bf16.gmra.mrb[0].mxu0 %v124
  %v564 = vpop.f32.mrb[0].mxu0
  %v565 = vadd.f32 0.0, %v564
  %v566 = vpop.f32.mrb[0].mxu0
  %v567 = vpop.f32.mrb[0].mxu0
  %v568 = vadd.f32 0.0, %v567
  %v569 = vpop.f32.mrb[0].mxu0
  %570 = vmatprep.mubr.bf16.mxu0 0
  %571 = vmatmul.mubr.bf16.gmra.mrb[0].mxu0 %v125
  %v572 = vpop.f32.mrb[0].mxu0
  %v573 = vadd.f32 0.0, %v572
  %v574 = vpop.f32.mrb[0].mxu0
  %v575 = vpop.f32.mrb[0].mxu0
  %v576 = vadd.f32 0.0, %v575
  %v577 = vpop.f32.mrb[0].mxu0
  %578 = vmatprep.mubr.bf16.mxu0 0
  %579 = vmatmul.mubr.bf16.gmra.mrb[0].mxu0 %v126
  %v580 = vpop.f32.mrb[0].mxu0
  %v581 = vadd.f32 0.0, %v580
  %v582 = vpop.f32.mrb[0].mxu0
  %v583 = vpop.f32.mrb[0].mxu0
  %v584 = vadd.f32 0.0, %v583
  %v585 = vpop.f32.mrb[0].mxu0
  %586 = vmatprep.mubr.bf16.mxu0 0
  %587 = vmatmul.mubr.bf16.gmra.mrb[0].mxu0 %v127
  %v588 = vpop.f32.mrb[0].mxu0
  %v589 = vadd.f32 0.0, %v588
  %v590 = vpop.f32.mrb[0].mxu0
  %v591 = vpop.f32.mrb[0].mxu0
  %v592 = vadd.f32 0.0, %v591
  %v593 = vpop.f32.mrb[0].mxu0
  %594 = vmatprep.mubr.bf16.mxu0 0
  %595 = vmatmul.mubr.bf16.gmra.mrb[0].mxu0 %v128
  %v596 = vpop.f32.mrb[0].mxu0
  %v597 = vadd.f32 0.0, %v596
  %v598 = vpop.f32.mrb[0].mxu0
  %v599 = vpop.f32.mrb[0].mxu0
  %v600 = vadd.f32 0.0, %v599
  %v601 = vpop.f32.mrb[0].mxu0
  %602 = vmatprep.mubr.bf16.mxu0 0
  %603 = vmatmul.mubr.bf16.gmra.mrb[0].mxu0 %v129
  %v604 = vpop.f32.mrb[0].mxu0
  %v605 = vadd.f32 0.0, %v604
  %v606 = vpop.f32.mrb[0].mxu0
  %v607 = vpop.f32.mrb[0].mxu0
  %v608 = vpop.f32.mrb[0].mxu0
  %609 = vdwg.mxu0
  %s610 = sld [smem:[#allocation2]]
  %vm611 = vcmp.ge.f32.partialorder %v237, 0.0
  %vm612 = vcmp.ge.f32.partialorder %v240, 0.0
  %vm613 = vcmp.ge.f32.partialorder %v245, 0.0
  %vm614 = vcmp.ge.f32.partialorder %v248, 0.0
  %vm615 = vcmp.ge.f32.partialorder %v253, 0.0
  %vm616 = vcmp.ge.f32.partialorder %v256, 0.0
  %vm617 = vcmp.ge.f32.partialorder %v261, 0.0
  %vm618 = vcmp.ge.f32.partialorder %v264, 0.0
  %vm619 = vcmp.ge.f32.partialorder %v269, 0.0
  %vm620 = vcmp.ge.f32.partialorder %v272, 0.0
  %vm621 = vcmp.ge.f32.partialorder %v277, 0.0
  %vm622 = vcmp.ge.f32.partialorder %v280, 0.0
  %vm623 = vcmp.ge.f32.partialorder %v285, 0.0
  %vm624 = vcmp.ge.f32.partialorder %v288, 0.0
  %vm625 = vcmp.ge.f32.partialorder %v293, 0.0
  %vm626 = vcmp.ge.f32.partialorder %v296, 0.0
  %vm627 = vcmp.ge.f32.partialorder %v301, 0.0
  %vm628 = vcmp.ge.f32.partialorder %v304, 0.0
  %vm629 = vcmp.ge.f32.partialorder %v309, 0.0
  %vm630 = vcmp.ge.f32.partialorder %v312, 0.0
  %vm631 = vcmp.ge.f32.partialorder %v317, 0.0
  %vm632 = vcmp.ge.f32.partialorder %v320, 0.0
  %vm633 = vcmp.ge.f32.partialorder %v325, 0.0
  %vm634 = vcmp.ge.f32.partialorder %v328, 0.0
  %vm635 = vcmp.ge.f32.partialorder %v333, 0.0
  %vm636 = vcmp.ge.f32.partialorder %v373, 0.0
  %vm637 = vcmp.ge.f32.partialorder %v376, 0.0
  %vm638 = vcmp.ge.f32.partialorder %v381, 0.0
  %vm639 = vcmp.ge.f32.partialorder %v384, 0.0
  %vm640 = vcmp.ge.f32.partialorder %v389, 0.0
  %vm641 = vcmp.ge.f32.partialorder %v392, 0.0
  %vm642 = vcmp.ge.f32.partialorder %v397, 0.0
  %vm643 = vcmp.ge.f32.partialorder %v400, 0.0
  %vm644 = vcmp.ge.f32.partialorder %v405, 0.0
  %vm645 = vcmp.ge.f32.partialorder %v408, 0.0
  %vm646 = vcmp.ge.f32.partialorder %v413, 0.0
  %vm647 = vcmp.ge.f32.partialorder %v416, 0.0
  %vm648 = vcmp.ge.f32.partialorder %v421, 0.0
  %vm649 = vcmp.ge.f32.partialorder %v424, 0.0
  %vm650 = vcmp.ge.f32.partialorder %v429, 0.0
  %vm651 = vcmp.ge.f32.partialorder %v432, 0.0
  %vm652 = vcmp.ge.f32.partialorder %v437, 0.0
  %vm653 = vcmp.ge.f32.partialorder %v440, 0.0
  %vm654 = vcmp.ge.f32.partialorder %v445, 0.0
  %vm655 = vcmp.ge.f32.partialorder %v448, 0.0
  %vm656 = vcmp.ge.f32.partialorder %v453, 0.0
  %vm657 = vcmp.ge.f32.partialorder %v456, 0.0
  %vm658 = vcmp.ge.f32.partialorder %v461, 0.0
  %vm659 = vcmp.ge.f32.partialorder %v464, 0.0
  %vm660 = vcmp.ge.f32.partialorder %v469, 0.0
  %vm661 = vcmp.ge.f32.partialorder %v509, 0.0
  %vm662 = vcmp.ge.f32.partialorder %v512, 0.0
  %vm663 = vcmp.ge.f32.partialorder %v517, 0.0
  %vm664 = vcmp.ge.f32.partialorder %v520, 0.0
  %vm665 = vcmp.ge.f32.partialorder %v525, 0.0
  %vm666 = vcmp.ge.f32.partialorder %v528, 0.0
  %vm667 = vcmp.ge.f32.partialorder %v533, 0.0
  %vm668 = vcmp.ge.f32.partialorder %v536, 0.0
  %vm669 = vcmp.ge.f32.partialorder %v541, 0.0
  %vm670 = vcmp.ge.f32.partialorder %v544, 0.0
  %vm671 = vcmp.ge.f32.partialorder %v549, 0.0
  %vm672 = vcmp.ge.f32.partialorder %v552, 0.0
  %vm673 = vcmp.ge.f32.partialorder %v557, 0.0
  %vm674 = vcmp.ge.f32.partialorder %v560, 0.0
  %vm675 = vcmp.ge.f32.partialorder %v565, 0.0
  %vm676 = vcmp.ge.f32.partialorder %v568, 0.0
  %vm677 = vcmp.ge.f32.partialorder %v573, 0.0
  %vm678 = vcmp.ge.f32.partialorder %v576, 0.0
  %vm679 = vcmp.ge.f32.partialorder %v581, 0.0
  %vm680 = vcmp.ge.f32.partialorder %v584, 0.0
  %vm681 = vcmp.ge.f32.partialorder %v589, 0.0
  %vm682 = vcmp.ge.f32.partialorder %v592, 0.0
  %vm683 = vcmp.ge.f32.partialorder %v597, 0.0
  %vm684 = vcmp.ge.f32.partialorder %v600, 0.0
  %vm685 = vcmp.ge.f32.partialorder %v605, 0.0
  %v686 = vstv %s610
  %v687 = vmul.f32 %v686, %v237
  %v688 = vmul.f32 %v686, %v240
  %v689 = vmul.f32 %v686, %v245
  %v690 = vmul.f32 %v686, %v248
  %v691 = vmul.f32 %v686, %v253
  %v692 = vmul.f32 %v686, %v256
  %v693 = vmul.f32 %v686, %v261
  %v694 = vmul.f32 %v686, %v264
  %v695 = vmul.f32 %v686, %v269
  %v696 = vmul.f32 %v686, %v272
  %v697 = vmul.f32 %v686, %v277
  %v698 = vmul.f32 %v686, %v280
  %v699 = vmul.f32 %v686, %v285
  %v700 = vmul.f32 %v686, %v288
  %v701 = vmul.f32 %v686, %v293
  %v702 = vmul.f32 %v686, %v296
  %v703 = vmul.f32 %v686, %v301
  %v704 = vmul.f32 %v686, %v304
  %v705 = vmul.f32 %v686, %v309
  %v706 = vmul.f32 %v686, %v312
  %v707 = vmul.f32 %v686, %v317
  %v708 = vmul.f32 %v686, %v320
  %v709 = vmul.f32 %v686, %v325
  %v710 = vmul.f32 %v686, %v328
  %v711 = vmul.f32 %v686, %v333
  %v712 = vmul.f32 %v686, %v373
  %v713 = vmul.f32 %v686, %v376
  %v714 = vmul.f32 %v686, %v381
  %v715 = vmul.f32 %v686, %v384
  %v716 = vmul.f32 %v686, %v389
  %v717 = vmul.f32 %v686, %v392
  %v718 = vmul.f32 %v686, %v397
  %v719 = vmul.f32 %v686, %v400
  %v720 = vmul.f32 %v686, %v405
  %v721 = vmul.f32 %v686, %v408
  %v722 = vmul.f32 %v686, %v413
  %v723 = vmul.f32 %v686, %v416
  %v724 = vmul.f32 %v686, %v421
  %v725 = vmul.f32 %v686, %v424
  %v726 = vmul.f32 %v686, %v429
  %v727 = vmul.f32 %v686, %v432
  %v728 = vmul.f32 %v686, %v437
  %v729 = vmul.f32 %v686, %v440
  %v730 = vmul.f32 %v686, %v445
  %v731 = vmul.f32 %v686, %v448
  %v732 = vmul.f32 %v686, %v453
  %v733 = vmul.f32 %v686, %v456
  %v734 = vmul.f32 %v686, %v461
  %v735 = vmul.f32 %v686, %v464
  %v736 = vmul.f32 %v686, %v469
  %v737 = vmul.f32 %v686, %v509
  %v738 = vmul.f32 %v686, %v512
  %v739 = vmul.f32 %v686, %v517
  %v740 = vmul.f32 %v686, %v520
  %v741 = vmul.f32 %v686, %v525
  %v742 = vmul.f32 %v686, %v528
  %v743 = vmul.f32 %v686, %v533
  %v744 = vmul.f32 %v686, %v536
  %v745 = vmul.f32 %v686, %v541
  %v746 = vmul.f32 %v686, %v544
  %v747 = vmul.f32 %v686, %v549
  %v748 = vmul.f32 %v686, %v552
  %v749 = vmul.f32 %v686, %v557
  %v750 = vmul.f32 %v686, %v560
  %v751 = vmul.f32 %v686, %v565
  %v752 = vmul.f32 %v686, %v568
  %v753 = vmul.f32 %v686, %v573
  %v754 = vmul.f32 %v686, %v576
  %v755 = vmul.f32 %v686, %v581
  %v756 = vmul.f32 %v686, %v584
  %v757 = vmul.f32 %v686, %v589
  %v758 = vmul.f32 %v686, %v592
  %v759 = vmul.f32 %v686, %v597
  %v760 = vmul.f32 %v686, %v600
  %v761 = vmul.f32 %v686, %v605
  %v762 = vsel %vm611, %v237, %v687
  %v763 = vsel %vm612, %v240, %v688
  %v764 = vsel %vm613, %v245, %v689
  %v765 = vsel %vm614, %v248, %v690
  %v766 = vsel %vm615, %v253, %v691
  %v767 = vsel %vm616, %v256, %v692
  %v768 = vsel %vm617, %v261, %v693
  %v769 = vsel %vm618, %v264, %v694
  %v770 = vsel %vm619, %v269, %v695
  %v771 = vsel %vm620, %v272, %v696
  %v772 = vsel %vm621, %v277, %v697
  %v773 = vsel %vm622, %v280, %v698
  %v774 = vsel %vm623, %v285, %v699
  %v775 = vsel %vm624, %v288, %v700
  %v776 = vsel %vm625, %v293, %v701
  %v777 = vsel %vm626, %v296, %v702
  %v778 = vsel %vm627, %v301, %v703
  %v779 = vsel %vm628, %v304, %v704
  %v780 = vsel %vm629, %v309, %v705
  %v781 = vsel %vm630, %v312, %v706
  %v782 = vsel %vm631, %v317, %v707
  %v783 = vsel %vm632, %v320, %v708
  %v784 = vsel %vm633, %v325, %v709
  %v785 = vsel %vm634, %v328, %v710
  %v786 = vsel %vm635, %v333, %v711
  %v787 = vsel %vm636, %v373, %v712
  %v788 = vsel %vm637, %v376, %v713
  %v789 = vsel %vm638, %v381, %v714
  %v790 = vsel %vm639, %v384, %v715
  %v791 = vsel %vm640, %v389, %v716
  %v792 = vsel %vm641, %v392, %v717
  %v793 = vsel %vm642, %v397, %v718
  %v794 = vsel %vm643, %v400, %v719
  %v795 = vsel %vm644, %v405, %v720
  %v796 = vsel %vm645, %v408, %v721
  %v797 = vsel %vm646, %v413, %v722
  %v798 = vsel %vm647, %v416, %v723
  %v799 = vsel %vm648, %v421, %v724
  %v800 = vsel %vm649, %v424, %v725
  %v801 = vsel %vm650, %v429, %v726
  %v802 = vsel %vm651, %v432, %v727
  %v803 = vsel %vm652, %v437, %v728
  %v804 = vsel %vm653, %v440, %v729
  %v805 = vsel %vm654, %v445, %v730
  %v806 = vsel %vm655, %v448, %v731
  %v807 = vsel %vm656, %v453, %v732
  %v808 = vsel %vm657, %v456, %v733
  %v809 = vsel %vm658, %v461, %v734
  %v810 = vsel %vm659, %v464, %v735
  %v811 = vsel %vm660, %v469, %v736
  %v812 = vsel %vm661, %v509, %v737
  %v813 = vsel %vm662, %v512, %v738
  %v814 = vsel %vm663, %v517, %v739
  %v815 = vsel %vm664, %v520, %v740
  %v816 = vsel %vm665, %v525, %v741
  %v817 = vsel %vm666, %v528, %v742
  %v818 = vsel %vm667, %v533, %v743
  %v819 = vsel %vm668, %v536, %v744
  %v820 = vsel %vm669, %v541, %v745
  %v821 = vsel %vm670, %v544, %v746
  %v822 = vsel %vm671, %v549, %v747
  %v823 = vsel %vm672, %v552, %v748
  %v824 = vsel %vm673, %v557, %v749
  %v825 = vsel %vm674, %v560, %v750
  %v826 = vsel %vm675, %v565, %v751
  %v827 = vsel %vm676, %v568, %v752
  %v828 = vsel %vm677, %v573, %v753
  %v829 = vsel %vm678, %v576, %v754
  %v830 = vsel %vm679, %v581, %v755
  %v831 = vsel %vm680, %v584, %v756
  %v832 = vsel %vm681, %v589, %v757
  %v833 = vsel %vm682, %v592, %v758
  %v834 = vsel %vm683, %v597, %v759
  %v835 = vsel %vm684, %v600, %v760
  %v836 = vsel %vm685, %v605, %v761
  %vm837 = vcmask 785408
  %838 = vst.msk [vmem:[%s3] sm:$0xff] %vm837, %v762
  %839 = vst.msk [vmem:[%s3 + $0x8] sm:$0xff] %vm837, %v763
  %840 = vst.msk [vmem:[%s3 + $0x10] sm:$0xff] %vm837, %v764
  %841 = vst.msk [vmem:[%s3 + $0x18] sm:$0xff] %vm837, %v765
  %842 = vst.msk [vmem:[%s3 + $0x20] sm:$0xff] %vm837, %v766
  %843 = vst.msk [vmem:[%s3 + $0x28] sm:$0xff] %vm837, %v767
  %844 = vst.msk [vmem:[%s3 + $0x30] sm:$0xff] %vm837, %v768
  %845 = vst.msk [vmem:[%s3 + $0x38] sm:$0xff] %vm837, %v769
  %846 = vst.msk [vmem:[%s3 + $0x40] sm:$0xff] %vm837, %v770
  %847 = vst.msk [vmem:[%s3 + $0x48] sm:$0xff] %vm837, %v771
  %848 = vst.msk [vmem:[%s3 + $0x50] sm:$0xff] %vm837, %v772
  %849 = vst.msk [vmem:[%s3 + $0x58] sm:$0xff] %vm837, %v773
  %850 = vst.msk [vmem:[%s3 + $0x60] sm:$0xff] %vm837, %v774
  %851 = vst.msk [vmem:[%s3 + $0x68] sm:$0xff] %vm837, %v775
  %852 = vst.msk [vmem:[%s3 + $0x70] sm:$0xff] %vm837, %v776
  %853 = vst.msk [vmem:[%s3 + $0x78] sm:$0xff] %vm837, %v777
  %854 = vst.msk [vmem:[%s3 + $0x80] sm:$0xff] %vm837, %v778
  %855 = vst.msk [vmem:[%s3 + $0x88] sm:$0xff] %vm837, %v779
  %856 = vst.msk [vmem:[%s3 + $0x90] sm:$0xff] %vm837, %v780
  %857 = vst.msk [vmem:[%s3 + $0x98] sm:$0xff] %vm837, %v781
  %858 = vst.msk [vmem:[%s3 + $0xa0] sm:$0xff] %vm837, %v782
  %859 = vst.msk [vmem:[%s3 + $0xa8] sm:$0xff] %vm837, %v783
  %860 = vst.msk [vmem:[%s3 + $0xb0] sm:$0xff] %vm837, %v784
  %861 = vst.msk [vmem:[%s3 + $0xb8] sm:$0xff] %vm837, %v785
  %862 = vst.msk [vmem:[%s3 + $0xc0] sm:$0xff] %vm837, %v786
  %863 = vst.msk [vmem:[%s3 + $0xc8] sm:$0xff] %vm837, %v787
  %864 = vst.msk [vmem:[%s3 + $0xd0] sm:$0xff] %vm837, %v788
  %865 = vst.msk [vmem:[%s3 + $0xd8] sm:$0xff] %vm837, %v789
  %866 = vst.msk [vmem:[%s3 + $0xe0] sm:$0xff] %vm837, %v790
  %867 = vst.msk [vmem:[%s3 + $0xe8] sm:$0xff] %vm837, %v791
  %868 = vst.msk [vmem:[%s3 + $0xf0] sm:$0xff] %vm837, %v792
  %869 = vst.msk [vmem:[%s3 + $0xf8] sm:$0xff] %vm837, %v793
  %870 = vst.msk [vmem:[%s3 + $0x100] sm:$0xff] %vm837, %v794
  %871 = vst.msk [vmem:[%s3 + $0x108] sm:$0xff] %vm837, %v795
  %872 = vst.msk [vmem:[%s3 + $0x110] sm:$0xff] %vm837, %v796
  %873 = vst.msk [vmem:[%s3 + $0x118] sm:$0xff] %vm837, %v797
  %874 = vst.msk [vmem:[%s3 + $0x120] sm:$0xff] %vm837, %v798
  %875 = vst.msk [vmem:[%s3 + $0x128] sm:$0xff] %vm837, %v799
  %876 = vst.msk [vmem:[%s3 + $0x130] sm:$0xff] %vm837, %v800
  %877 = vst.msk [vmem:[%s3 + $0x138] sm:$0xff] %vm837, %v801
  %878 = vst.msk [vmem:[%s3 + $0x140] sm:$0xff] %vm837, %v802
  %879 = vst.msk [vmem:[%s3 + $0x148] sm:$0xff] %vm837, %v803
  %880 = vst.msk [vmem:[%s3 + $0x150] sm:$0xff] %vm837, %v804
  %881 = vst.msk [vmem:[%s3 + $0x158] sm:$0xff] %vm837, %v805
  %882 = vst.msk [vmem:[%s3 + $0x160] sm:$0xff] %vm837, %v806
  %883 = vst.msk [vmem:[%s3 + $0x168] sm:$0xff] %vm837, %v807
  %884 = vst.msk [vmem:[%s3 + $0x170] sm:$0xff] %vm837, %v808
  %885 = vst.msk [vmem:[%s3 + $0x178] sm:$0xff] %vm837, %v809
  %886 = vst.msk [vmem:[%s3 + $0x180] sm:$0xff] %vm837, %v810
  %887 = vst.msk [vmem:[%s3 + $0x188] sm:$0xff] %vm837, %v811
  %888 = vst.msk [vmem:[%s3 + $0x190] sm:$0xff] %vm837, %v812
  %889 = vst.msk [vmem:[%s3 + $0x198] sm:$0xff] %vm837, %v813
  %890 = vst.msk [vmem:[%s3 + $0x1a0] sm:$0xff] %vm837, %v814
  %891 = vst.msk [vmem:[%s3 + $0x1a8] sm:$0xff] %vm837, %v815
  %892 = vst.msk [vmem:[%s3 + $0x1b0] sm:$0xff] %vm837, %v816
  %893 = vst.msk [vmem:[%s3 + $0x1b8] sm:$0xff] %vm837, %v817
  %894 = vst.msk [vmem:[%s3 + $0x1c0] sm:$0xff] %vm837, %v818
  %895 = vst.msk [vmem:[%s3 + $0x1c8] sm:$0xff] %vm837, %v819
  %896 = vst.msk [vmem:[%s3 + $0x1d0] sm:$0xff] %vm837, %v820
  %897 = vst.msk [vmem:[%s3 + $0x1d8] sm:$0xff] %vm837, %v821
  %898 = vst.msk [vmem:[%s3 + $0x1e0] sm:$0xff] %vm837, %v822
  %899 = vst.msk [vmem:[%s3 + $0x1e8] sm:$0xff] %vm837, %v823
  %900 = vst.msk [vmem:[%s3 + $0x1f0] sm:$0xff] %vm837, %v824
  %901 = vst.msk [vmem:[%s3 + $0x1f8] sm:$0xff] %vm837, %v825
  %902 = vst.msk [vmem:[%s3 + $0x200] sm:$0xff] %vm837, %v826
  %903 = vst.msk [vmem:[%s3 + $0x208] sm:$0xff] %vm837, %v827
  %904 = vst.msk [vmem:[%s3 + $0x210] sm:$0xff] %vm837, %v828
  %905 = vst.msk [vmem:[%s3 + $0x218] sm:$0xff] %vm837, %v829
  %906 = vst.msk [vmem:[%s3 + $0x220] sm:$0xff] %vm837, %v830
  %907 = vst.msk [vmem:[%s3 + $0x228] sm:$0xff] %vm837, %v831
  %908 = vst.msk [vmem:[%s3 + $0x230] sm:$0xff] %vm837, %v832
  %909 = vst.msk [vmem:[%s3 + $0x238] sm:$0xff] %vm837, %v833
  %910 = vst.msk [vmem:[%s3 + $0x240] sm:$0xff] %vm837, %v834
  %911 = vst.msk [vmem:[%s3 + $0x248] sm:$0xff] %vm837, %v835
  %912 = vst.msk [vmem:[%s3 + $0x250] sm:$0xff] %vm837, %v836
  // Predicated region
  $region14: #{tpu_custom_call.1} parent=0 // pred_check
    _
  $region15: #{tpu_custom_call.1} parent=0 // pred_check_branch
    %914 = sbr.rel (0) target = $region17
  $region16: #{tpu_custom_call.1} parent=0 // pred_region
    _
  $region17: #{tpu_custom_call.1} parent=0 // pred_fallthru
    _
  // Predicated region
  $region18: #{tpu_custom_call.1} parent=0 // pred_check
    _
  $region19: #{tpu_custom_call.1} parent=0 // pred_check_branch
    %916 = sbr.rel (0) target = $region21
  $region20: #{tpu_custom_call.1} parent=0 // pred_region
    _
  $region21: #{tpu_custom_call.1} parent=0 // pred_fallthru
    _

</llo_original>
